<compile_context>
chip_gen: v7x
topology: tpu7x:2x2x1
jax: 0.10.0
libtpu: 0.0.40
codegen_flags: <defaults>
</compile_context>

<pallas_src>
import jax
import jax.numpy as jnp
from jax.experimental import pallas as pl
from jax.experimental.pallas import tpu as pltpu


LANE = 128


def _round_up(x, m):
    return (x + m - 1) // m * m


def _cdiv(a, b):
    return (a + b - 1) // b


# ----------------------------------------------------------------------------
# Pallas kernels
# ----------------------------------------------------------------------------
def _conv1_ds_fused_kernel(g_ref, w_ref, s_ref, b_ref, h_ref, r_ref):
    """One matmul, two outputs.

    acc = g @ [W1 | Wd]            (f32 accumulation, [tn, 2*cp])
    h   = relu(acc[:, :cp]*s1+b1)  (conv1 + BN + ReLU)          -> bf16
    r   =      acc[:, cp:]*sd+bd   (1x1 downsample + BN)        -> bf16
    """
    cp = h_ref.shape[-1]
    acc = jnp.dot(g_ref[...], w_ref[...], preferred_element_type=jnp.float32)
    y = acc * s_ref[...] + b_ref[...]            # s/b carry [s1|sd], [b1|bd]
    h_ref[...] = jnp.maximum(y[:, :cp], 0.0).astype(h_ref.dtype)
    r_ref[...] = y[:, cp:].astype(r_ref.dtype)


def _conv2_bn_res_relu_kernel(g_ref, w_ref, s_ref, b_ref, r_ref, o_ref):
    """out = relu((g@W2)*s2 + b2 + res).  K offsets fused into the contraction."""
    acc = jnp.dot(g_ref[...], w_ref[...], preferred_element_type=jnp.float32)
    y = acc * s_ref[...] + b_ref[...] + r_ref[...].astype(jnp.float32)
    o_ref[...] = jnp.maximum(y, 0.0).astype(o_ref.dtype)


# ----------------------------------------------------------------------------
# pallas_call wrappers
# ----------------------------------------------------------------------------
def _vmem_limit_bytes():
    """Generation-aware scoped-VMEM limit (review: ~96 MiB v5e/v6e, ~48 MiB v7x)."""
    try:
        cap = pltpu.get_tpu_info().vmem_capacity_bytes
    except Exception:
        cap = 64 * 1024 * 1024          # conservative (v7x-sized) fallback
    return int(min(96 * 1024 * 1024, cap * 3 // 4))


def _compiler_params():
    return pltpu.CompilerParams(
        dimension_semantics=("parallel",),
        vmem_limit_bytes=_vmem_limit_bytes(),
    )


def _const_spec(shape):
    """Constant-index-map operand: fetched once, single-buffered (no dead buf)."""
    return pl.BlockSpec(shape, lambda i: (0, 0), pipeline_mode=pl.Buffered(1))


def conv1_with_downsample(g, w, s, b, *, tn, cout_pad):
    """g: [n_pad, kc_pad] bf16; w: [kc_pad, 2*cout_pad] bf16; s/b: [1, 2*cout_pad] f32."""
    n_pad, kc_pad = g.shape
    two_cp = w.shape[1]
    row_spec = pl.BlockSpec((tn, kc_pad), lambda i: (i, 0))
    out_spec = pl.BlockSpec((tn, cout_pad), lambda i: (i, 0))
    return pl.pallas_call(
        _conv1_ds_fused_kernel,
        out_shape=(
            jax.ShapeDtypeStruct((n_pad, cout_pad), jnp.bfloat16),   # h1
            jax.ShapeDtypeStruct((n_pad, cout_pad), jnp.bfloat16),   # res
        ),
        grid_spec=pltpu.PrefetchScalarGridSpec(
            num_scalar_prefetch=0,
            grid=(n_pad // tn,),
            in_specs=[
                row_spec,
                _const_spec((kc_pad, two_cp)),
                _const_spec((1, two_cp)),
                _const_spec((1, two_cp)),
            ],
            out_specs=[out_spec, out_spec],
        ),
        compiler_params=_compiler_params(),
    )(g, w, s, b)


def conv2_bn_residual_relu(g, w, s, b, res, *, tn):
    n_pad, kc_pad = g.shape
    cout_pad = w.shape[1]
    return pl.pallas_call(
        _conv2_bn_res_relu_kernel,
        out_shape=jax.ShapeDtypeStruct((n_pad, cout_pad), jnp.float32),
        grid_spec=pltpu.PrefetchScalarGridSpec(
            num_scalar_prefetch=0,
            grid=(n_pad // tn,),
            in_specs=[
                pl.BlockSpec((tn, kc_pad), lambda i: (i, 0)),
                _const_spec((kc_pad, cout_pad)),
                _const_spec((1, cout_pad)),
                _const_spec((1, cout_pad)),
                pl.BlockSpec((tn, cout_pad), lambda i: (i, 0)),   # res (bf16)
            ],
            out_specs=pl.BlockSpec((tn, cout_pad), lambda i: (i, 0)),
        ),
        compiler_params=_compiler_params(),
    )(g, w, s, b, res)


# ----------------------------------------------------------------------------
# JAX glue: rulebook, gather/flatten/pad, weight packing, BN fold
# ----------------------------------------------------------------------------
def build_neighbor_map(coords, ks=3, dilation=1):
    """coords: [N,4] int32 (b,x,y,z) -> nbr: [K,N] int32, -1 where missing."""
    r = ks // 2
    ax = jnp.arange(-r, r + 1, dtype=jnp.int32) * dilation
    offs = jnp.stack(jnp.meshgrid(ax, ax, ax, indexing="ij"), -1).reshape(-1, 3)
    offs4 = jnp.concatenate(
        [jnp.zeros((offs.shape[0], 1), jnp.int32), offs], axis=1
    )  # never cross batches
    query = coords[None, :, :] + offs4[:, None, :]                     # [K,N,4]
    match = jnp.all(query[:, :, None, :] == coords[None, None, :, :], axis=-1)
    has = jnp.any(match, axis=-1)
    idx = jnp.argmax(match, axis=-1)
    return jnp.where(has, idx, -1).astype(jnp.int32)                   # [K,N]


def gather_flat(feats, nbr, kc_pad, n_pad):
    """feats [N,C], nbr [K,N] -> bf16 [n_pad, kc_pad], zeros for missing."""
    K, N = nbr.shape
    C = feats.shape[1]
    safe = jnp.clip(nbr, 0)
    g = jnp.where((nbr >= 0)[..., None], feats[safe], 0.0)             # [K,N,C]
    g = jnp.transpose(g, (1, 0, 2)).reshape(N, K * C)                  # [N,K*C]
    g = jnp.pad(g, ((0, n_pad - N), (0, kc_pad - K * C)))
    return g.astype(jnp.bfloat16)


def _pack_weights(W, kc_pad, cout_pad):
    """W: [K, Cin, Cout] -> bf16 [kc_pad, cout_pad], zero padded."""
    K, Cin, Cout = W.shape
    Wf = W.reshape(K * Cin, Cout)
    Wp = jnp.zeros((kc_pad, cout_pad), jnp.float32).at[: K * Cin, :Cout].set(Wf)
    return Wp.astype(jnp.bfloat16)


def _pack_conv1_ds_weights(W1, Wd, kc_pad, cout_pad):
    """[kc_pad, 2*cout_pad] bf16: W1 in output lanes [0,cout_pad); the 1x1
    downsample Wd (at the identity/center kernel offset rows) in lanes
    [cout_pad, 2*cout_pad).  One matmul then serves both branches."""
    K, Cin, Cout = W1.shape
    w = jnp.zeros((kc_pad, 2 * cout_pad), jnp.float32)
    w = w.at[: K * Cin, :Cout].set(W1.reshape(K * Cin, Cout))
    c0 = (K // 2) * Cin
    w = w.at[c0:c0 + Cin, cout_pad:cout_pad + Cout].set(Wd)
    return w.astype(jnp.bfloat16)


def _embed_lane(v, width, offset=0):
    return jnp.zeros((1, width), jnp.float32).at[0, offset:offset + v.shape[0]].set(v)


def fold_bn(gamma, beta, mean, var, eps=1e-5):
    scale = gamma / jnp.sqrt(var + eps)
    return scale, beta - mean * scale


def _pick_tile(n, target=512):
    """Row-tile size: big (>=85% of HBM roofline at 512+), multiples of 16
    (bf16 sublane pack), >=2 grid steps when possible (v7x megacore), and
    small padding waste."""
    n16 = _round_up(max(n, 1), 16)
    steps = _cdiv(n16, target)
    if n16 >= 32:
        steps = max(steps, 2)
    tn = _round_up(_cdiv(n16, steps), 16)
    n_pad = tn * steps
    return tn, n_pad


# ----------------------------------------------------------------------------
# Full SparseConv3dRes forward (inc != outc, stride=1 -> downsample = 1x1 conv+BN)
# ----------------------------------------------------------------------------
def sparse_conv3d_res(feats, coords, params, *, ks=3, dilation=1, tn_target=512):
    N, Cin = feats.shape
    K = ks ** 3
    Cout = params["W1"].shape[-1]

    cout_pad = _round_up(Cout, LANE)
    kc1_pad = _round_up(K * Cin, LANE)
    kc2_pad = _round_up(K * Cout, LANE)

    tn, n_pad = _pick_tile(N, tn_target)

    nbr = build_neighbor_map(coords, ks=ks, dilation=dilation)         # [K,N]

    s1, b1 = fold_bn(*params["bn1"])
    s2, b2 = fold_bn(*params["bn2"])
    sd, bd = fold_bn(*params["bn_d"])

    # ---- kernel A: conv1 + 1x1 downsample in a single 256-wide matmul ------
    Wa = _pack_conv1_ds_weights(params["W1"], params["Wd"], kc1_pad, cout_pad)
    sa = _embed_lane(s1, 2 * cout_pad, 0) + _embed_lane(sd, 2 * cout_pad, cout_pad)
    ba = _embed_lane(b1, 2 * cout_pad, 0) + _embed_lane(bd, 2 * cout_pad, cout_pad)

    g1 = gather_flat(feats, nbr, kc1_pad, n_pad)
    h1, res = conv1_with_downsample(g1, Wa, sa, ba, tn=tn, cout_pad=cout_pad)

    # Padded rows (N..n_pad) of h1/res hold relu(b1)/bd; they are sliced away
    # before the g2 gather and the final return, so they never leak.

    # ---- kernel B: conv2 + BN2 + residual add + ReLU ------------------------
    W2p = _pack_weights(params["W2"], kc2_pad, cout_pad)
    s2p = _embed_lane(s2, cout_pad)
    b2p = _embed_lane(b2, cout_pad)
    g2 = gather_flat(h1[:N, :Cout], nbr, kc2_pad, n_pad)
    out = conv2_bn_residual_relu(g2, W2p, s2p, b2p, res, tn=tn)
    return out[:N, :Cout]


# ----------------------------------------------------------------------------
# Pure-JAX reference (mirrors the bf16-input / f32-accumulate MXU numerics,
# including the bf16 storage of res and h1)
# ----------------------------------------------------------------------------
def reference(feats, coords, params, *, ks=3, dilation=1):
    nbr = build_neighbor_map(coords, ks=ks, dilation=dilation)

    def conv(x, W):
        safe = jnp.clip(nbr, 0)
        g = jnp.where((nbr >= 0)[..., None], x[safe], 0.0)
        g = g.astype(jnp.bfloat16).astype(jnp.float32)
        Wb = W.astype(jnp.bfloat16).astype(jnp.float32)
        return jnp.einsum("knc,kcd->nd", g, Wb)

    sd, bd = fold_bn(*params["bn_d"])
    res = (
        feats.astype(jnp.bfloat16).astype(jnp.float32)
        @ params["Wd"].astype(jnp.bfloat16).astype(jnp.float32)
    ) * sd + bd
    res = res.astype(jnp.bfloat16).astype(jnp.float32)   # kernel stores res as bf16
    s1, b1 = fold_bn(*params["bn1"])
    h1 = jnp.maximum(conv(feats, params["W1"]) * s1 + b1, 0.0)
    s2, b2 = fold_bn(*params["bn2"])
    h2 = conv(h1, params["W2"]) * s2 + b2
    return jnp.maximum(h2 + res, 0.0)


if __name__ == "__main__":
    B, Cin, Cout, D = 2, 8, 16, 16        # batch, in-ch, out-ch, voxel grid size
    N_per, KS = 32, 3
    N = B * N_per                          # 64 active voxels total

    key = jax.random.PRNGKey(0)
    keys = jax.random.split(key, 16)

    # deterministic unique sparse coordinates per batch
    coords_list = []
    for b in range(B):
        flat = jax.random.permutation(keys[b], D * D * D)[:N_per]
        xs, ys, zs = flat // (D * D), (flat // D) % D, flat % D
        bcol = jnp.full((N_per,), b, jnp.int32)
        coords_list.append(jnp.stack([bcol, xs, ys, zs], axis=1).astype(jnp.int32))
    coords = jnp.concatenate(coords_list, axis=0)                      # [N,4]
    feats = jax.random.normal(keys[2], (N, Cin), jnp.float32)          # [N,Cin]

    K = KS ** 3

    def bn_params(k, c):
        k1, k2, k3, k4 = jax.random.split(k, 4)
        gamma = 1.0 + 0.1 * jax.random.normal(k1, (c,), jnp.float32)
        beta = 0.1 * jax.random.normal(k2, (c,), jnp.float32)
        mean = 0.1 * jax.random.normal(k3, (c,), jnp.float32)
        var = 1.0 + 0.1 * jnp.abs(jax.random.normal(k4, (c,), jnp.float32))
        return gamma, beta, mean, var

    params = {
        "W1": 0.1 * jax.random.normal(keys[3], (K, Cin, Cout), jnp.float32),
        "W2": 0.1 * jax.random.normal(keys[4], (K, Cout, Cout), jnp.float32),
        "Wd": 0.1 * jax.random.normal(keys[5], (Cin, Cout), jnp.float32),
        "bn1": bn_params(keys[6], Cout),
        "bn2": bn_params(keys[7], Cout),
        "bn_d": bn_params(keys[8], Cout),
    }

    out = sparse_conv3d_res(feats, coords, params)
    out = jax.block_until_ready(out)

    ref = reference(feats, coords, params)
    assert out.shape == (N, Cout)
    # bf16 inputs / f32 accumulation in both paths; tolerance covers summation
    # order + 1-ulp bf16 rounding differences on the intermediates h1/res.
    assert jnp.allclose(out, ref, atol=1e-2, rtol=1e-2), "mismatch vs reference"

    print("KERNEL_OK")
</pallas_src>

<mosaic_0001>
module attributes {stable_mosaic.version = 11 : i64} {
  func.func @_conv1_ds_fused_kernel(%arg0: i32, %arg1: memref<32x256xbf16, #tpu.memory_space<vmem>>, %arg2: memref<256x256xbf16, #tpu.memory_space<vmem>>, %arg3: memref<1x256xf32, #tpu.memory_space<vmem>>, %arg4: memref<1x256xf32, #tpu.memory_space<vmem>>, %arg5: memref<32x128xbf16, #tpu.memory_space<vmem>>, %arg6: memref<32x128xbf16, #tpu.memory_space<vmem>>) attributes {dimension_semantics = [#tpu.dimension_semantics<parallel>], iteration_bounds = array<i64: 2>, scalar_prefetch = 0 : i64, scratch_operands = 0 : i64, tpu.core_type = #tpu.core_type<tc>, window_params = [{transform_indices = @transform_0, window_bounds = array<i64: 32, 256>}, {pipeline_mode = #tpu.pipeline_mode<synchronous>, transform_indices = @transform_1, window_bounds = array<i64: 256, 256>}, {pipeline_mode = #tpu.pipeline_mode<synchronous>, transform_indices = @transform_2, window_bounds = array<i64: 1, 256>}, {pipeline_mode = #tpu.pipeline_mode<synchronous>, transform_indices = @transform_3, window_bounds = array<i64: 1, 256>}, {transform_indices = @transform_4, window_bounds = array<i64: 32, 128>}, {transform_indices = @transform_5, window_bounds = array<i64: 32, 128>}]} {
    %c0 = arith.constant 0 : index
    %c0_0 = arith.constant 0 : index
    %0 = vector.load %arg1[%c0, %c0_0] : memref<32x256xbf16, #tpu.memory_space<vmem>>, vector<32x256xbf16>
    %c0_1 = arith.constant 0 : index
    %c0_2 = arith.constant 0 : index
    %1 = vector.load %arg2[%c0_1, %c0_2] : memref<256x256xbf16, #tpu.memory_space<vmem>>, vector<256x256xbf16>
    %cst = arith.constant dense<0.000000e+00> : vector<32x256xf32>
    %2 = tpu.matmul %0, %1, %cst {dimension_numbers = #tpu.dot_dimension_numbers<[1], [0], [0], [1], [0, 0, 1, 1], [], []>} : vector<32x256xbf16>, vector<256x256xbf16>, vector<32x256xf32> -> vector<32x256xf32>
    %c0_3 = arith.constant 0 : index
    %c0_4 = arith.constant 0 : index
    %3 = vector.load %arg3[%c0_3, %c0_4] : memref<1x256xf32, #tpu.memory_space<vmem>>, vector<1x256xf32>
    %4 = vector.broadcast %3 : vector<1x256xf32> to vector<32x256xf32>
    %5 = arith.mulf %2, %4 : vector<32x256xf32>
    %c0_5 = arith.constant 0 : index
    %c0_6 = arith.constant 0 : index
    %6 = vector.load %arg4[%c0_5, %c0_6] : memref<1x256xf32, #tpu.memory_space<vmem>>, vector<1x256xf32>
    %7 = vector.broadcast %6 : vector<1x256xf32> to vector<32x256xf32>
    %8 = arith.addf %5, %7 : vector<32x256xf32>
    %9 = vector.extract_strided_slice %8 {offsets = [0, 0], sizes = [32, 128], strides = [1, 1]} : vector<32x256xf32> to vector<32x128xf32>
    %cst_7 = arith.constant 0.000000e+00 : f32
    %10 = vector.broadcast %cst_7 : f32 to vector<32x128xf32>
    %11 = arith.maximumf %9, %10 : vector<32x128xf32>
    %12 = arith.truncf %11 : vector<32x128xf32> to vector<32x128xbf16>
    %c0_8 = arith.constant 0 : index
    %c0_9 = arith.constant 0 : index
    %13 = vector.load %arg5[%c0_8, %c0_9] : memref<32x128xbf16, #tpu.memory_space<vmem>>, vector<32x128xbf16>
    tpu.vector_store %arg5[%c0_8, %c0_9], %12 {strides = array<i32>} : memref<32x128xbf16, #tpu.memory_space<vmem>>, vector<32x128xbf16>,
    %14 = vector.extract_strided_slice %8 {offsets = [0, 128], sizes = [32, 128], strides = [1, 1]} : vector<32x256xf32> to vector<32x128xf32>
    %15 = arith.truncf %14 : vector<32x128xf32> to vector<32x128xbf16>
    %c0_10 = arith.constant 0 : index
    %c0_11 = arith.constant 0 : index
    %16 = vector.load %arg6[%c0_10, %c0_11] : memref<32x128xbf16, #tpu.memory_space<vmem>>, vector<32x128xbf16>
    tpu.vector_store %arg6[%c0_10, %c0_11], %15 {strides = array<i32>} : memref<32x128xbf16, #tpu.memory_space<vmem>>, vector<32x128xbf16>,
    return
  }
  func.func @transform_0(%arg0: i32) -> (i32, i32) {
    %c0_i32 = arith.constant 0 : i32
    %c0_i32_0 = arith.constant 0 : i32
    return %arg0, %c0_i32 : i32, i32
  }
  func.func @transform_1(%arg0: i32) -> (i32, i32) {
    %c0_i32 = arith.constant 0 : i32
    %c0_i32_0 = arith.constant 0 : i32
    %c0_i32_1 = arith.constant 0 : i32
    return %c0_i32, %c0_i32_0 : i32, i32
  }
  func.func @transform_2(%arg0: i32) -> (i32, i32) {
    %c0_i32 = arith.constant 0 : i32
    %c0_i32_0 = arith.constant 0 : i32
    %c0_i32_1 = arith.constant 0 : i32
    return %c0_i32, %c0_i32_0 : i32, i32
  }
  func.func @transform_3(%arg0: i32) -> (i32, i32) {
    %c0_i32 = arith.constant 0 : i32
    %c0_i32_0 = arith.constant 0 : i32
    %c0_i32_1 = arith.constant 0 : i32
    return %c0_i32, %c0_i32_0 : i32, i32
  }
  func.func @transform_4(%arg0: i32) -> (i32, i32) {
    %c0_i32 = arith.constant 0 : i32
    %c0_i32_0 = arith.constant 0 : i32
    return %arg0, %c0_i32 : i32, i32
  }
  func.func @transform_5(%arg0: i32) -> (i32, i32) {
    %c0_i32 = arith.constant 0 : i32
    %c0_i32_0 = arith.constant 0 : i32
    return %arg0, %c0_i32 : i32, i32
  }
}

</mosaic_0001>

<llo_original>
// kernel: tpu_custom_call.1
$region0: #{tpu_custom_call.1}
  #allocation0 [shape = 'u32[]', space=smem, size = 0x4, offset = 0x4, fixed_abs, tag = 'smem constant byte address 0x4 - core index']
  #allocation1 [shape = 'u32[144,128]{1,0:T(1,128)}', space=vmem, size = 0x12000, scoped, tag = 'internal scratch']
  %s0 = inlined_call_operand.hbm [shape: bf16[64,256], index: 0, kind: input, shape index: {}]
  %s1 = inlined_call_operand.hbm [shape: bf16[256,256], index: 1, kind: input, shape index: {}]
  %s2 = inlined_call_operand.vmem [shape: f32[1,256], index: 2, kind: input, shape index: {}]
  %s3 = inlined_call_operand.vmem [shape: f32[1,256], index: 3, kind: input, shape index: {}]
  %s4 = inlined_call_operand.hbm [shape: bf16[64,128], index: 4, kind: output, shape index: {0}]
  %s5 = inlined_call_operand.hbm [shape: bf16[64,128], index: 5, kind: output, shape index: {1}]
  %6 = xla_tuple %s4, %s5
  %s7 = sld [smem:[#allocation0]]
  $region65: #{tpu_custom_call.1} parent=0
    _
  %s9 = ssub.s32 1, %s7
  %s10 = scalar_select 0, %s9, %s7
  $region1: #{tpu_custom_call.1} parent=0
    #allocation2 [shape = 'u8[32768]{0}', space=vmem, size = 0x8000, scoped, tag = 'input window, operand 0']
    #allocation3 [shape = 's32[2]{0}', space=sflag, size = 0x8, scoped, tag = 'scoped memory for tpu_custom_call.1']
    #allocation4 [shape = 's32[2]{0}', space=sflag, size = 0x8, scoped, tag = 'scoped memory for tpu_custom_call.1']
    #allocation5 [shape = 'u8[131072]{0}', space=vmem, size = 0x20000, scoped, tag = 'input window, operand 1, single buffered']
    #allocation6 [shape = 's32[1]{0}', space=sflag, size = 0x4, scoped, tag = 'scoped memory for tpu_custom_call.1']
    #allocation7 [shape = 'u8[16384]{0}', space=vmem, size = 0x4000, scoped, tag = 'output window, operand 0']
    #allocation8 [shape = 'u8[16384]{0}', space=vmem, size = 0x4000, scoped, tag = 'output window, operand 1']
    #allocation9 [shape = 's32[2]{0}', space=sflag, size = 0x8, scoped, tag = 'scoped memory for tpu_custom_call.1']
    %11 = vsyncpa [#allocation3], 0
    %s12 = scalar_lea.sflag [#allocation3], 1
    %13 = vsyncpa %s12, 0
    %14 = vsyncpa [#allocation6], 0
    %15 = vsyncpa [#allocation4], 0
    %s16 = scalar_lea.sflag [#allocation4], 1
    %17 = vsyncpa %s16, 0
    %18 = vsyncpa [#allocation9], 0
    %s19 = scalar_lea.sflag [#allocation9], 1
    %20 = vsyncpa %s19, 0
    loop: start=0, step=1, limit=4
    $region2: #{tpu_custom_call.1} parent=1 // loop_pre_header
      _
    $region3: #{tpu_custom_call.1} parent=1 // loop_header
      %s22 = sphi 0, %s26
      %p23 = scmp.ge.s32.totalorder %s22, 4
      %s32 = sphi 0, %s34
      %s35 = sphi 0, %s32
      %s36 = sphi 0, %s35
      %s52 = sphi 0, %s36
      %s56 = sphi 0, %s56
      %s58 = sphi 0, %s56
      %s59 = sphi 0, %s58
      %s73 = sphi 0, %s59
      %s77 = sphi 0, %s77
      %s79 = sphi 0, %s77
      %s80 = sphi 0, %s79
      %s94 = sphi 0, %s80
      %s98 = sphi 0, %s98
      %s100 = sphi 0, %s98
      %s101 = sphi 0, %s100
      %s115 = sphi 0, %s101
      %s121 = sphi 0, %s123
      %s124 = sphi 0, %s121
      %s125 = sphi 0, %s124
      %s141 = sphi 0, %s125
      %s147 = sphi 0, %s149
      %s150 = sphi 0, %s147
      %s151 = sphi 0, %s150
      %s167 = sphi 0, %s151
    $region4: #{tpu_custom_call.1} parent=1 // loop_header_branch
      %25 = sbr.rel (%p23) target = $region8
    $region5: #{tpu_custom_call.1} parent=1 // loop_body
      %s27 = ssub.s32 %s22, 1
      %s28 = ssub.s32 %s22, 2
      %s29 = sadd.s32 %s22, 1
      %s30 = ssub.s32 %s22, %s29
      %p31 = scmp.eq.s32.totalorder %s30, 0
      %s33 = sadd.s32 %s32, 1
      %s34 = scalar_select %p31, %s32, %s33
      %p37 = pneg %p31
      %p38 = scmp.eq.s32.totalorder %s22, 1
      %p39 = por %p37, %p38
      %p40 = scmp.ne.s32.totalorder %s32, %s35
      %p41 = scmp.eq.s32.totalorder %s22, 0
      %p42 = por %p40, %p41
      %p43 = scmp.ne.s32.totalorder %s32, %s35
      %p44 = scmp.eq.s32.totalorder %s27, 1
      %p45 = por %p43, %p44
      %p46 = scmp.ne.s32.totalorder %s35, %s36
      %p47 = scmp.eq.s32.totalorder %s27, 0
      %p48 = por %p46, %p47
      %p49 = scmp.ne.s32.totalorder %s35, %s36
      %p50 = scmp.eq.s32.totalorder %s28, 1
      %p51 = por %p49, %p50
      %p53 = scmp.ne.s32.totalorder %s36, %s52
      %p54 = scmp.eq.s32.totalorder %s28, 0
      %p55 = por %p53, %p54
      %s57 = sadd.s32 %s56, 1
      %p60 = scmp.eq.s32.totalorder %s22, 1
      %p61 = scmp.ne.s32.totalorder %s56, %s58
      %p62 = scmp.eq.s32.totalorder %s22, 0
      %p63 = por %p61, %p62
      %p64 = scmp.ne.s32.totalorder %s56, %s58
      %p65 = scmp.eq.s32.totalorder %s27, 1
      %p66 = por %p64, %p65
      %p67 = scmp.ne.s32.totalorder %s58, %s59
      %p68 = scmp.eq.s32.totalorder %s27, 0
      %p69 = por %p67, %p68
      %p70 = scmp.ne.s32.totalorder %s58, %s59
      %p71 = scmp.eq.s32.totalorder %s28, 1
      %p72 = por %p70, %p71
      %p74 = scmp.ne.s32.totalorder %s59, %s73
      %p75 = scmp.eq.s32.totalorder %s28, 0
      %p76 = por %p74, %p75
      %s78 = sadd.s32 %s77, 1
      %p81 = scmp.eq.s32.totalorder %s22, 1
      %p82 = scmp.ne.s32.totalorder %s77, %s79
      %p83 = scmp.eq.s32.totalorder %s22, 0
      %p84 = por %p82, %p83
      %p85 = scmp.ne.s32.totalorder %s77, %s79
      %p86 = scmp.eq.s32.totalorder %s27, 1
      %p87 = por %p85, %p86
      %p88 = scmp.ne.s32.totalorder %s79, %s80
      %p89 = scmp.eq.s32.totalorder %s27, 0
      %p90 = por %p88, %p89
      %p91 = scmp.ne.s32.totalorder %s79, %s80
      %p92 = scmp.eq.s32.totalorder %s28, 1
      %p93 = por %p91, %p92
      %p95 = scmp.ne.s32.totalorder %s80, %s94
      %p96 = scmp.eq.s32.totalorder %s28, 0
      %p97 = por %p95, %p96
      %s99 = sadd.s32 %s98, 1
      %p102 = scmp.eq.s32.totalorder %s22, 1
      %p103 = scmp.ne.s32.totalorder %s98, %s100
      %p104 = scmp.eq.s32.totalorder %s22, 0
      %p105 = por %p103, %p104
      %p106 = scmp.ne.s32.totalorder %s98, %s100
      %p107 = scmp.eq.s32.totalorder %s27, 1
      %p108 = por %p106, %p107
      %p109 = scmp.ne.s32.totalorder %s100, %s101
      %p110 = scmp.eq.s32.totalorder %s27, 0
      %p111 = por %p109, %p110
      %p112 = scmp.ne.s32.totalorder %s100, %s101
      %p113 = scmp.eq.s32.totalorder %s28, 1
      %p114 = por %p112, %p113
      %p116 = scmp.ne.s32.totalorder %s101, %s115
      %p117 = scmp.eq.s32.totalorder %s28, 0
      %p118 = por %p116, %p117
      %s119 = ssub.s32 %s22, %s29
      %p120 = scmp.eq.s32.totalorder %s119, 0
      %s122 = sadd.s32 %s121, 1
      %s123 = scalar_select %p120, %s121, %s122
      %p126 = pneg %p120
      %p127 = scmp.eq.s32.totalorder %s22, 1
      %p128 = por %p126, %p127
      %p129 = scmp.ne.s32.totalorder %s121, %s124
      %p130 = scmp.eq.s32.totalorder %s22, 0
      %p131 = por %p129, %p130
      %p132 = scmp.ne.s32.totalorder %s121, %s124
      %p133 = scmp.eq.s32.totalorder %s27, 1
      %p134 = por %p132, %p133
      %p135 = scmp.ne.s32.totalorder %s124, %s125
      %p136 = scmp.eq.s32.totalorder %s27, 0
      %p137 = por %p135, %p136
      %p138 = scmp.ne.s32.totalorder %s124, %s125
      %p139 = scmp.eq.s32.totalorder %s28, 1
      %p140 = por %p138, %p139
      %p142 = scmp.ne.s32.totalorder %s125, %s141
      %p143 = scmp.eq.s32.totalorder %s28, 0
      %p144 = por %p142, %p143
      %s145 = ssub.s32 %s22, %s29
      %p146 = scmp.eq.s32.totalorder %s145, 0
      %s148 = sadd.s32 %s147, 1
      %s149 = scalar_select %p146, %s147, %s148
      %p152 = pneg %p146
      %p153 = scmp.eq.s32.totalorder %s22, 1
      %p154 = por %p152, %p153
      %p155 = scmp.ne.s32.totalorder %s147, %s150
      %p156 = scmp.eq.s32.totalorder %s22, 0
      %p157 = por %p155, %p156
      %p158 = scmp.ne.s32.totalorder %s147, %s150
      %p159 = scmp.eq.s32.totalorder %s27, 1
      %p160 = por %p158, %p159
      %p161 = scmp.ne.s32.totalorder %s150, %s151
      %p162 = scmp.eq.s32.totalorder %s27, 0
      %p163 = por %p161, %p162
      %p164 = scmp.ne.s32.totalorder %s150, %s151
      %p165 = scmp.eq.s32.totalorder %s28, 1
      %p166 = por %p164, %p165
      %p168 = scmp.ne.s32.totalorder %s151, %s167
      %p169 = scmp.eq.s32.totalorder %s28, 0
      %p170 = por %p168, %p169
      %p171 = scmp.le.s32.totalorder 1, %s22
      %p172 = scmp.lt.s32.totalorder %s22, 3
      %p173 = pnand %p171, %p172
      %p174 = pneg %p173
      // Predicated region
      $region9: #{tpu_custom_call.1} parent=5 // pred_check
        _
      $region10: #{tpu_custom_call.1} parent=5 // pred_check_branch
        %176 = sbr.rel (%p173) target = $region12
      $region11: #{tpu_custom_call.1} parent=5 // pred_region
        %s177 = ssub.s32 %s22, 1
        // Predicated region
        $region13: #{tpu_custom_call.1} parent=11 // pred_check
          %p178 = pneg %p69
        $region14: #{tpu_custom_call.1} parent=11 // pred_check_branch
          %180 = sbr.rel (%p178) target = $region16
        $region15: #{tpu_custom_call.1} parent=11 // pred_region
          %s182 = ssub.s32 4096, 4096
          %183 = vsyncadd [#allocation6], %s182
          %s184 = sshll.u32 [#allocation5], 4
          %s185 = int_to_ptr.vmem [resolvable:$true] %s184
          %190 = dma.hbm_to_vmem [thread:$0]  %s1, 4096, %s185, [#allocation6], 128, 128, 8
        $region16: #{tpu_custom_call.1} parent=11 // pred_fallthru
          _
        // Predicated region
        $region17: #{tpu_custom_call.1} parent=11 // pred_check
          %p191 = pneg %p90
        $region18: #{tpu_custom_call.1} parent=11 // pred_check_branch
          %193 = sbr.rel (%p191) target = $region20
        $region19: #{tpu_custom_call.1} parent=11 // pred_region
          _
        $region20: #{tpu_custom_call.1} parent=11 // pred_fallthru
          _
        // Predicated region
        $region21: #{tpu_custom_call.1} parent=11 // pred_check
          %p194 = pneg %p111
        $region22: #{tpu_custom_call.1} parent=11 // pred_check_branch
          %196 = sbr.rel (%p194) target = $region24
        $region23: #{tpu_custom_call.1} parent=11 // pred_region
          _
        $region24: #{tpu_custom_call.1} parent=11 // pred_fallthru
          _
      $region12: #{tpu_custom_call.1} parent=5 // pred_fallthru
        _
      %p197 = scmp.lt.s32.totalorder %s22, 2
      // Predicated region
      $region25: #{tpu_custom_call.1} parent=5 // pred_check
        %p198 = pneg %p197
      $region26: #{tpu_custom_call.1} parent=5 // pred_check_branch
        %200 = sbr.rel (%p198) target = $region28
      $region27: #{tpu_custom_call.1} parent=5 // pred_region
        // Predicated region
        $region29: #{tpu_custom_call.1} parent=27 // pred_check
          %p201 = pneg %p42
        $region30: #{tpu_custom_call.1} parent=27 // pred_check_branch
          %203 = sbr.rel (%p201) target = $region32
        $region31: #{tpu_custom_call.1} parent=27 // pred_region
          %s204 = sand.u32 %s32, 1
          %s205 = scalar_lea.sflag [#allocation3], %s204
          %s206 = sand.u32 %s32, 1
          %s207 = smul.addr %s206, 32
          %s208 = scalar_lea.vmem [#allocation2], %s207
          %s209 = smul.u32 4, %s22
          %s211 = ssub.s32 512, 512
          %212 = vsyncadd %s205, %s211
          %s213 = smul.addr %s209, 2
          %s214 = smul.addr %s213, 64
          %s215 = scalar_lea.hbm %s0, %s214
          %s216 = sshll.u32 %s208, 4
          %s217 = int_to_ptr.vmem [resolvable:$true] %s216
          %222 = dma.hbm_to_vmem [thread:$0]  %s215, 512, %s217, %s205, 128, 128, 8
        $region32: #{tpu_custom_call.1} parent=27 // pred_fallthru
          _
      $region28: #{tpu_custom_call.1} parent=5 // pred_fallthru
        _
      %p223 = scmp.le.s32.totalorder 1, %s22
      %p224 = scmp.lt.s32.totalorder %s22, 3
      %p225 = pnand %p223, %p224
      %p226 = pneg %p225
      // Predicated region
      $region33: #{tpu_custom_call.1} parent=5 // pred_check
        _
      $region34: #{tpu_custom_call.1} parent=5 // pred_check_branch
        %228 = sbr.rel (%p225) target = $region36
      $region35: #{tpu_custom_call.1} parent=5 // pred_region
        %s229 = ssub.s32 %s22, 1
        %s230 = sand.u32 %s35, 1
        %s231 = scalar_lea.sflag [#allocation3], %s230
        %s232 = sand.u32 %s35, 1
        %s233 = smul.addr %s232, 32
        %s234 = scalar_lea.vmem [#allocation2], %s233
        // Predicated region
        $region37: #{tpu_custom_call.1} parent=35 // pred_check
          %p235 = pneg %p48
        $region38: #{tpu_custom_call.1} parent=35 // pred_check_branch
          %237 = sbr.rel (%p235) target = $region40
        $region39: #{tpu_custom_call.1} parent=35 // pred_region
          %238 = dma.done %s231, 512
        $region40: #{tpu_custom_call.1} parent=35 // pred_fallthru
          _
        // Predicated region
        $region41: #{tpu_custom_call.1} parent=35 // pred_check
          %p239 = pneg %p69
        $region42: #{tpu_custom_call.1} parent=35 // pred_check_branch
          %241 = sbr.rel (%p239) target = $region44
        $region43: #{tpu_custom_call.1} parent=35 // pred_region
          %242 = dma.done [#allocation6], 4096
        $region44: #{tpu_custom_call.1} parent=35 // pred_fallthru
          _
        %s243 = sand.u32 %s35, 1
        %s244 = scalar_lea.sflag [#allocation3], %s243
        %s245 = sand.u32 %s35, 1
        %s246 = smul.addr %s245, 32
        %s247 = scalar_lea.vmem [#allocation2], %s246
        %p248 = pneg %p48
        %p249 = pneg %p45
        %p250 = pneg %p69
        %p251 = pneg %p66
        %p252 = pneg %p90
        %p253 = pneg %p87
        %p254 = pneg %p111
        %p255 = pneg %p108
        %p256 = pneg %p137
        %p257 = pneg %p134
        %s258 = sand.u32 %s124, 1
        %s259 = scalar_lea.sflag [#allocation4], %s258
        %s260 = sand.u32 %s124, 1
        %s261 = smul.addr %s260, 16
        %s262 = scalar_lea.vmem [#allocation7], %s261
        %p263 = pneg %p163
        %p264 = pneg %p160
        %s265 = sand.u32 %s150, 1
        %s266 = scalar_lea.sflag [#allocation9], %s265
        %s267 = sand.u32 %s150, 1
        %s268 = smul.addr %s267, 16
        %s269 = scalar_lea.vmem [#allocation8], %s268
        %s270 = smul.u32 4, %s27
        %s271 = smul.u32 4, %s27
        %s272 = smul.u32 4, %s27
        %v273 = vld [vmem:[%s234] sm:$0xff]
        %v274 = vld [vmem:[%s234 + $0x8] sm:$0xff]
        %v275 = vld [vmem:[%s234 + $0x10] sm:$0xff]
        %v276 = vld [vmem:[%s234 + $0x18] sm:$0xff]
        %v277 = vld [vmem:[#allocation5] sm:$0xff]
        %v278 = vld [vmem:[#allocation5 + $0x8] sm:$0xff]
        %v279 = vld [vmem:[#allocation5 + $0x10] sm:$0xff]
        %v280 = vld [vmem:[#allocation5 + $0x18] sm:$0xff]
        %v281 = vld [vmem:[#allocation5 + $0x20] sm:$0xff]
        %v282 = vld [vmem:[#allocation5 + $0x28] sm:$0xff]
        %v283 = vld [vmem:[#allocation5 + $0x30] sm:$0xff]
        %v284 = vld [vmem:[#allocation5 + $0x38] sm:$0xff]
        %v285 = vld [vmem:[#allocation5 + $0x40] sm:$0xff]
        %v286 = vld [vmem:[#allocation5 + $0x48] sm:$0xff]
        %v287 = vld [vmem:[#allocation5 + $0x50] sm:$0xff]
        %v288 = vld [vmem:[#allocation5 + $0x58] sm:$0xff]
        %v289 = vld [vmem:[#allocation5 + $0x60] sm:$0xff]
        %v290 = vld [vmem:[#allocation5 + $0x68] sm:$0xff]
        %v291 = vld [vmem:[#allocation5 + $0x70] sm:$0xff]
        %v292 = vld [vmem:[#allocation5 + $0x78] sm:$0xff]
        %v293 = vld [vmem:[#allocation5 + $0x80] sm:$0xff]
        %v294 = vld [vmem:[#allocation5 + $0x88] sm:$0xff]
        %v295 = vld [vmem:[#allocation5 + $0x90] sm:$0xff]
        %v296 = vld [vmem:[#allocation5 + $0x98] sm:$0xff]
        %v297 = vld [vmem:[#allocation5 + $0xa0] sm:$0xff]
        %v298 = vld [vmem:[#allocation5 + $0xa8] sm:$0xff]
        %v299 = vld [vmem:[#allocation5 + $0xb0] sm:$0xff]
        %v300 = vld [vmem:[#allocation5 + $0xb8] sm:$0xff]
        %v301 = vld [vmem:[#allocation5 + $0xc0] sm:$0xff]
        %v302 = vld [vmem:[#allocation5 + $0xc8] sm:$0xff]
        %v303 = vld [vmem:[#allocation5 + $0xd0] sm:$0xff]
        %v304 = vld [vmem:[#allocation5 + $0xd8] sm:$0xff]
        %v305 = vld [vmem:[#allocation5 + $0xe0] sm:$0xff]
        %v306 = vld [vmem:[#allocation5 + $0xe8] sm:$0xff]
        %v307 = vld [vmem:[#allocation5 + $0xf0] sm:$0xff]
        %v308 = vld [vmem:[#allocation5 + $0xf8] sm:$0xff]
        %v313 = vunpack.c.l.b16 %v273
        %v314 = vunpack.c.h.b16 %v273
        %v315 = vunpack.c.l.b16 %v274
        %v316 = vunpack.c.h.b16 %v274
        %v317 = vunpack.c.l.b16 %v275
        %v318 = vunpack.c.h.b16 %v275
        %v319 = vunpack.c.l.b16 %v276
        %v320 = vunpack.c.h.b16 %v276
        %v321 = vpack.c.b16 %v315, %v313
        %v322 = vpack.c.b16 %v316, %v314
        %v323 = vpack.c.b16 %v319, %v317
        %v324 = vpack.c.b16 %v320, %v318
        %v361 = vunpack.c.l.b16 %v277
        %v362 = vunpack.c.h.b16 %v277
        %v363 = vunpack.c.l.b16 %v278
        %v364 = vunpack.c.h.b16 %v278
        %v365 = vunpack.c.l.b16 %v279
        %v366 = vunpack.c.h.b16 %v279
        %v367 = vunpack.c.l.b16 %v280
        %v368 = vunpack.c.h.b16 %v280
        %v369 = vunpack.c.l.b16 %v281
        %v370 = vunpack.c.h.b16 %v281
        %v371 = vunpack.c.l.b16 %v282
        %v372 = vunpack.c.h.b16 %v282
        %v373 = vunpack.c.l.b16 %v283
        %v374 = vunpack.c.h.b16 %v283
        %v375 = vunpack.c.l.b16 %v284
        %v376 = vunpack.c.h.b16 %v284
        %v377 = vunpack.c.l.b16 %v285
        %v378 = vunpack.c.h.b16 %v285
        %v379 = vunpack.c.l.b16 %v286
        %v380 = vunpack.c.h.b16 %v286
        %v381 = vunpack.c.l.b16 %v287
        %v382 = vunpack.c.h.b16 %v287
        %v383 = vunpack.c.l.b16 %v288
        %v384 = vunpack.c.h.b16 %v288
        %v385 = vunpack.c.l.b16 %v289
        %v386 = vunpack.c.h.b16 %v289
        %v387 = vunpack.c.l.b16 %v290
        %v388 = vunpack.c.h.b16 %v290
        %v389 = vunpack.c.l.b16 %v291
        %v390 = vunpack.c.h.b16 %v291
        %v391 = vunpack.c.l.b16 %v292
        %v392 = vunpack.c.h.b16 %v292
        %v393 = vunpack.c.l.b16 %v293
        %v394 = vunpack.c.h.b16 %v293
        %v395 = vunpack.c.l.b16 %v294
        %v396 = vunpack.c.h.b16 %v294
        %v397 = vunpack.c.l.b16 %v295
        %v398 = vunpack.c.h.b16 %v295
        %v399 = vunpack.c.l.b16 %v296
        %v400 = vunpack.c.h.b16 %v296
        %v401 = vunpack.c.l.b16 %v297
        %v402 = vunpack.c.h.b16 %v297
        %v403 = vunpack.c.l.b16 %v298
        %v404 = vunpack.c.h.b16 %v298
        %v405 = vunpack.c.l.b16 %v299
        %v406 = vunpack.c.h.b16 %v299
        %v407 = vunpack.c.l.b16 %v300
        %v408 = vunpack.c.h.b16 %v300
        %v409 = vunpack.c.l.b16 %v301
        %v410 = vunpack.c.h.b16 %v301
        %v411 = vunpack.c.l.b16 %v302
        %v412 = vunpack.c.h.b16 %v302
        %v413 = vunpack.c.l.b16 %v303
        %v414 = vunpack.c.h.b16 %v303
        %v415 = vunpack.c.l.b16 %v304
        %v416 = vunpack.c.h.b16 %v304
        %v417 = vunpack.c.l.b16 %v305
        %v418 = vunpack.c.h.b16 %v305
        %v419 = vunpack.c.l.b16 %v306
        %v420 = vunpack.c.h.b16 %v306
        %v421 = vunpack.c.l.b16 %v307
        %v422 = vunpack.c.h.b16 %v307
        %v423 = vunpack.c.l.b16 %v308
        %v424 = vunpack.c.h.b16 %v308
        %v425 = vpack.c.b16 %v363, %v361
        %v426 = vpack.c.b16 %v364, %v362
        %v427 = vpack.c.b16 %v367, %v365
        %v428 = vpack.c.b16 %v368, %v366
        %v429 = vpack.c.b16 %v371, %v369
        %v430 = vpack.c.b16 %v372, %v370
        %v431 = vpack.c.b16 %v375, %v373
        %v432 = vpack.c.b16 %v376, %v374
        %v433 = vpack.c.b16 %v379, %v377
        %v434 = vpack.c.b16 %v380, %v378
        %v435 = vpack.c.b16 %v383, %v381
        %v436 = vpack.c.b16 %v384, %v382
        %v437 = vpack.c.b16 %v387, %v385
        %v438 = vpack.c.b16 %v388, %v386
        %v439 = vpack.c.b16 %v391, %v389
        %v440 = vpack.c.b16 %v392, %v390
        %v441 = vpack.c.b16 %v395, %v393
        %v442 = vpack.c.b16 %v396, %v394
        %v443 = vpack.c.b16 %v399, %v397
        %v444 = vpack.c.b16 %v400, %v398
        %v445 = vpack.c.b16 %v403, %v401
        %v446 = vpack.c.b16 %v404, %v402
        %v447 = vpack.c.b16 %v407, %v405
        %v448 = vpack.c.b16 %v408, %v406
        %v449 = vpack.c.b16 %v411, %v409
        %v450 = vpack.c.b16 %v412, %v410
        %v451 = vpack.c.b16 %v415, %v413
        %v452 = vpack.c.b16 %v416, %v414
        %v453 = vpack.c.b16 %v419, %v417
        %v454 = vpack.c.b16 %v420, %v418
        %v455 = vpack.c.b16 %v423, %v421
        %v456 = vpack.c.b16 %v424, %v422
        %489 = vmatprep.subr.bf16.mxu0 %v426
        %490 = vmatpush1.bf16.msra.mxu0 %v425
        %491 = vmatprep.subr.bf16.mxu0 %v428
        %492 = vmatpush1.bf16.msra.mxu0 %v427
        %493 = vmatprep.subr.bf16.mxu0 %v430
        %494 = vmatpush1.bf16.msra.mxu0 %v429
        %495 = vmatprep.subr.bf16.mxu0 %v432
        %496 = vmatpush1.bf16.msra.mxu0 %v431
        %497 = vmatprep.subr.bf16.mxu0 %v434
        %498 = vmatpush1.bf16.msra.mxu0 %v433
        %499 = vmatprep.subr.bf16.mxu0 %v436
        %500 = vmatpush1.bf16.msra.mxu0 %v435
        %501 = vmatprep.subr.bf16.mxu0 %v438
        %502 = vmatpush1.bf16.msra.mxu0 %v437
        %503 = vmatprep.subr.bf16.mxu0 %v440
        %504 = vmatpush1.bf16.msra.mxu0 %v439
        %505 = vmatprep.subr.bf16.mxu0 %v442
        %506 = vmatpush1.bf16.msra.mxu0 %v441
        %507 = vmatprep.subr.bf16.mxu0 %v444
        %508 = vmatpush1.bf16.msra.mxu0 %v443
        %509 = vmatprep.subr.bf16.mxu0 %v446
        %510 = vmatpush1.bf16.msra.mxu0 %v445
        %511 = vmatprep.subr.bf16.mxu0 %v448
        %512 = vmatpush1.bf16.msra.mxu0 %v447
        %513 = vmatprep.subr.bf16.mxu0 %v450
        %514 = vmatpush1.bf16.msra.mxu0 %v449
        %515 = vmatprep.subr.bf16.mxu0 %v452
        %516 = vmatpush1.bf16.msra.mxu0 %v451
        %517 = vmatprep.subr.bf16.mxu0 %v454
        %518 = vmatpush1.bf16.msra.mxu0 %v453
        %519 = vmatprep.subr.bf16.mxu0 %v456
        %520 = vmatpush1.bf16.msra.mxu0 %v455
        %521 = vmatprep.mubr.bf16.mxu0 %v322
        %522 = vmatmul.mubr.bf16.gmra.mrb[0].mxu0 %v321
        %v523 = vpop.f32.mrb[0].mxu0
        %v524 = vadd.f32 0.0, %v523
        %v525 = vpop.f32.mrb[0].mxu0
        %v526 = vadd.f32 0.0, %v525
        %v527 = vpop.f32.mrb[0].mxu0
        %v528 = vadd.f32 0.0, %v527
        %v529 = vpop.f32.mrb[0].mxu0
        %v530 = vadd.f32 0.0, %v529
        %531 = vmatprep.mubr.bf16.mxu0 %v324
        %532 = vmatmul.mubr.bf16.gmra.mrb[0].mxu0 %v323
        %v533 = vpop.f32.mrb[0].mxu0
        %v534 = vadd.f32 0.0, %v533
        %v535 = vpop.f32.mrb[0].mxu0
        %v536 = vadd.f32 0.0, %v535
        %v537 = vpop.f32.mrb[0].mxu0
        %v538 = vadd.f32 0.0, %v537
        %v539 = vpop.f32.mrb[0].mxu0
        %v540 = vadd.f32 0.0, %v539
        %541 = vdwg.mxu0
        %v542 = vld [vmem:[%s2] sm:$0x3]
        %v544 = vlaneseq
        %v545 = vshrl.u32 %v544, 7
        %v546 = vsub.s32 0, %v545
        %v547 = vrot.slane %v542, %v546
        %v548 = vlaneseq
        %v549 = vshrl.u32 %v548, 7
        %v550 = vsub.s32 1, %v549
        %v551 = vrot.slane %v542, %v550
        %v554 = vmul.f32 %v524, %v547
        %v555 = vmul.f32 %v526, %v551
        %v556 = vmul.f32 %v528, %v547
        %v557 = vmul.f32 %v530, %v551
        %v558 = vmul.f32 %v534, %v547
        %v559 = vmul.f32 %v536, %v551
        %v560 = vmul.f32 %v538, %v547
        %v561 = vmul.f32 %v540, %v551
        %v562 = vld [vmem:[%s3] sm:$0x3]
        %v564 = vlaneseq
        %v565 = vshrl.u32 %v564, 7
        %v566 = vsub.s32 0, %v565
        %v567 = vrot.slane %v562, %v566
        %v568 = vlaneseq
        %v569 = vshrl.u32 %v568, 7
        %v570 = vsub.s32 1, %v569
        %v571 = vrot.slane %v562, %v570
        %v574 = vadd.f32 %v554, %v567
        %v575 = vadd.f32 %v555, %v571
        %v576 = vadd.f32 %v556, %v567
        %v577 = vadd.f32 %v557, %v571
        %v578 = vadd.f32 %v558, %v567
        %v579 = vadd.f32 %v559, %v571
        %v580 = vadd.f32 %v560, %v567
        %v581 = vadd.f32 %v561, %v571
        %v582 = vmax.f32 %v574, 0.0
        %v583 = vmax.f32 %v576, 0.0
        %v584 = vmax.f32 %v578, 0.0
        %v585 = vmax.f32 %v580, 0.0
        %v586 = vpack.c.bf16 %v583, %v582
        %v587 = vpack.c.bf16 %v585, %v584
        %v590 = vunpack.c.l.b16 %v586
        %v591 = vunpack.c.h.b16 %v586
        %v592 = vunpack.c.l.b16 %v587
        %v593 = vunpack.c.h.b16 %v587
        %v594 = vpack.c.b16 %v590, %v590
        %v595 = vpack.c.b16 %v591, %v591
        %v596 = vpack.c.b16 %v592, %v592
        %v597 = vpack.c.b16 %v593, %v593
        %602 = vst [vmem:[%s262] sm:$0xf] %v594
        %603 = vst [vmem:[%s262 + $0x4] sm:$0xf] %v595
        %604 = vst [vmem:[%s262 + $0x8] sm:$0xf] %v596
        %605 = vst [vmem:[%s262 + $0xc] sm:$0xf] %v597
        %v606 = vpack.c.bf16 %v577, %v575
        %v607 = vpack.c.bf16 %v581, %v579
        %v610 = vunpack.c.l.b16 %v606
        %v611 = vunpack.c.h.b16 %v606
        %v612 = vunpack.c.l.b16 %v607
        %v613 = vunpack.c.h.b16 %v607
        %v614 = vpack.c.b16 %v610, %v610
        %v615 = vpack.c.b16 %v611, %v611
        %v616 = vpack.c.b16 %v612, %v612
        %v617 = vpack.c.b16 %v613, %v613
        %622 = vst [vmem:[%s269] sm:$0xf] %v614
        %623 = vst [vmem:[%s269 + $0x4] sm:$0xf] %v615
        %624 = vst [vmem:[%s269 + $0x8] sm:$0xf] %v616
        %625 = vst [vmem:[%s269 + $0xc] sm:$0xf] %v617
        %s626 = sand.u32 %s124, 1
        %s627 = scalar_lea.sflag [#allocation4], %s626
        %s628 = sand.u32 %s124, 1
        %s629 = smul.addr %s628, 16
        %s630 = scalar_lea.vmem [#allocation7], %s629
        %s631 = sand.u32 %s150, 1
        %s632 = scalar_lea.sflag [#allocation9], %s631
        %s633 = sand.u32 %s150, 1
        %s634 = smul.addr %s633, 16
        %s635 = scalar_lea.vmem [#allocation8], %s634
        // Predicated region
        $region45: #{tpu_custom_call.1} parent=35 // pred_check
          %p636 = pneg %p134
        $region46: #{tpu_custom_call.1} parent=35 // pred_check_branch
          %638 = sbr.rel (%p636) target = $region48
        $region47: #{tpu_custom_call.1} parent=35 // pred_region
          %s639 = smul.u32 4, %s27
          %s641 = ssub.s32 256, 256
          %642 = vsyncadd %s627, %s641
          %s643 = smul.addr %s639, 64
          %s644 = scalar_lea.hbm %s4, %s643
          %s645 = sshll.u32 %s630, 4
          %s646 = int_to_ptr.vmem [resolvable:$true] %s645
          %651 = dma.vmem_to_hbm [thread:$0]  %s646, 256, %s644, %s627, 64, 64, 4
        $region48: #{tpu_custom_call.1} parent=35 // pred_fallthru
          _
        // Predicated region
        $region49: #{tpu_custom_call.1} parent=35 // pred_check
          %p652 = pneg %p160
        $region50: #{tpu_custom_call.1} parent=35 // pred_check_branch
          %654 = sbr.rel (%p652) target = $region52
        $region51: #{tpu_custom_call.1} parent=35 // pred_region
          %s655 = smul.u32 4, %s27
          %s657 = ssub.s32 256, 256
          %658 = vsyncadd %s632, %s657
          %s659 = smul.addr %s655, 64
          %s660 = scalar_lea.hbm %s5, %s659
          %s661 = sshll.u32 %s635, 4
          %s662 = int_to_ptr.vmem [resolvable:$true] %s661
          %667 = dma.vmem_to_hbm [thread:$0]  %s662, 256, %s660, %s632, 64, 64, 4
        $region52: #{tpu_custom_call.1} parent=35 // pred_fallthru
          _
      $region36: #{tpu_custom_call.1} parent=5 // pred_fallthru
        _
      %p668 = scmp.le.s32.totalorder 2, %s22
      // Predicated region
      $region53: #{tpu_custom_call.1} parent=5 // pred_check
        %p669 = pneg %p668
      $region54: #{tpu_custom_call.1} parent=5 // pred_check_branch
        %671 = sbr.rel (%p669) target = $region56
      $region55: #{tpu_custom_call.1} parent=5 // pred_region
        %s672 = ssub.s32 %s22, 2
        // Predicated region
        $region57: #{tpu_custom_call.1} parent=55 // pred_check
          %p673 = pneg %p140
        $region58: #{tpu_custom_call.1} parent=55 // pred_check_branch
          %675 = sbr.rel (%p673) target = $region60
        $region59: #{tpu_custom_call.1} parent=55 // pred_region
          %s676 = sand.u32 %s125, 1
          %s677 = scalar_lea.sflag [#allocation4], %s676
          %s678 = sand.u32 %s125, 1
          %s679 = smul.addr %s678, 16
          %s680 = scalar_lea.vmem [#allocation7], %s679
          %681 = dma.done %s677, 256
        $region60: #{tpu_custom_call.1} parent=55 // pred_fallthru
          _
        // Predicated region
        $region61: #{tpu_custom_call.1} parent=55 // pred_check
          %p682 = pneg %p166
        $region62: #{tpu_custom_call.1} parent=55 // pred_check_branch
          %684 = sbr.rel (%p682) target = $region64
        $region63: #{tpu_custom_call.1} parent=55 // pred_region
          %s685 = sand.u32 %s151, 1
          %s686 = scalar_lea.sflag [#allocation9], %s685
          %s687 = sand.u32 %s151, 1
          %s688 = smul.addr %s687, 16
          %s689 = scalar_lea.vmem [#allocation8], %s688
          %690 = dma.done %s686, 256
        $region64: #{tpu_custom_call.1} parent=55 // pred_fallthru
          _
      $region56: #{tpu_custom_call.1} parent=5 // pred_fallthru
        _
    $region6: #{tpu_custom_call.1} parent=1 // loop_footer
      %s26 = sadd.s32 1, %s22
    $region7: #{tpu_custom_call.1} parent=1 // loop_footer_branch
      %21 = sbr.rel target = $region3
    $region8: #{tpu_custom_call.1} parent=1 // loop_exit
      _
    %691 = vsyncpa [#allocation3], 1
    %s692 = scalar_lea.sflag [#allocation3], 1
    %693 = vsyncpa %s692, 1
    %694 = vsyncpa [#allocation6], 1
    %695 = vsyncpa [#allocation4], 1
    %s696 = scalar_lea.sflag [#allocation4], 1
    %697 = vsyncpa %s696, 1
    %698 = vsyncpa [#allocation9], 1
    %s699 = scalar_lea.sflag [#allocation9], 1
    %700 = vsyncpa %s699, 1

</llo_original>
